<compile_context>
chip_gen: v7x
topology: tpu7x:2x2x1
jax: 0.10.0
libtpu: 0.0.40
codegen_flags: <defaults>
</compile_context>

<pallas_src>
import functools

import jax
import jax.numpy as jnp
from jax.experimental import pallas as pl
from jax.experimental.pallas import tpu as pltpu


def _ls_ce_tile_kernel(x_ref, tgt_ref, part_ref, *, ignore_index, n_total, tile_n):
    i = pl.program_id(0)
    x = x_ref[...].astype(jnp.float32)            # (TILE_N, C)
    tn, c = x.shape

    # Mask rows that are padding (global row index >= n_total).
    row_idx = i * tile_n + jax.lax.broadcasted_iota(jnp.int32, (tn, 1), 0)
    row_ok = row_idx < n_total                    # (TILE_N, 1) bool

    # Numerically stable log-softmax pieces (never materialize full logp).
    m = jnp.max(x, axis=-1, keepdims=True)        # (TILE_N, 1)
    shifted = x - m
    lse = jnp.log(jnp.sum(jnp.exp(shifted), axis=-1, keepdims=True))
    sum_shifted = jnp.sum(shifted, axis=-1, keepdims=True)

    # -sum_c logp = C*lse - sum_c shifted   (no (N,C) logp temporary)
    row_neg_sum = c * lse - sum_shifted           # (TILE_N, 1)
    smooth_tile = jnp.sum(jnp.where(row_ok, row_neg_sum, 0.0))

    # NLL: gather the target logit via a masked lane reduce on `shifted`.
    tgt = tgt_ref[...]                            # (TILE_N, 1) int32
    col = jax.lax.broadcasted_iota(jnp.int32, (tn, c), 1)
    picked_shift = jnp.sum(jnp.where(col == tgt, shifted, 0.0),
                           axis=-1, keepdims=True)
    picked_logp = picked_shift - lse              # (TILE_N, 1)
    valid = jnp.logical_and(tgt != ignore_index, row_ok)
    nll_tile = -jnp.sum(jnp.where(valid, picked_logp, 0.0))
    n_valid_tile = jnp.sum(valid.astype(jnp.float32))

    # Emit the three partial scalars in lanes 0/1/2 of sublane 0 of a
    # lane-dense (8, 128) output block (zeros elsewhere).
    sub = jax.lax.broadcasted_iota(jnp.int32, (1, 8, 128), 1)
    lane = jax.lax.broadcasted_iota(jnp.int32, (1, 8, 128), 2)
    first = sub == 0
    part_ref[...] = jnp.where(first & (lane == 0), smooth_tile,
                    jnp.where(first & (lane == 1), nll_tile,
                    jnp.where(first & (lane == 2), n_valid_tile, 0.0)))


def _choose_tile_n(n, c, itemsize, target_tile_bytes=4 * 1024 * 1024):
    """Pick TILE_N so one logits tile is ~a few MiB (double-buffered fits the
    scoped-VMEM defaults on v5e/v6e/v7x), rounded to a multiple of 8."""
    rows = max(1, target_tile_bytes // max(1, c * itemsize))
    tile_n = max(8, (rows // 8) * 8)
    n_pad8 = ((n + 7) // 8) * 8
    return min(tile_n, n_pad8)


def label_smoothing_cross_entropy(output, target, *, smoothing=0.1,
                                  reduction="mean", ignore_index=-100,
                                  tile_n=None):
    """output: (N, C) float logits (any float dtype, kept native across DMA);
    target: (N,) int labels. Returns a scalar loss.

    NOTE: if every row has target == ignore_index, the 'mean' NLL divides by
    zero (NaN) -- same behavior as F.nll_loss.
    """
    if reduction not in ("mean", "sum"):
        raise ValueError("only 'mean' and 'sum' reductions are supported")

    n, c = output.shape
    itemsize = jnp.dtype(output.dtype).itemsize
    if tile_n is None:
        tile_n = _choose_tile_n(n, c, itemsize)
    tile_n = max(8, (int(tile_n) // 8) * 8)

    n_pad = ((n + tile_n - 1) // tile_n) * tile_n
    num_tiles = n_pad // tile_n

    tgt2d = target.astype(jnp.int32).reshape(n, 1)
    x = output                      # keep native dtype (bf16/f32) across HBM->VMEM
    if n_pad != n:
        x = jnp.pad(x, ((0, n_pad - n), (0, 0)))
        tgt2d = jnp.pad(tgt2d, ((0, n_pad - n), (0, 0)),
                        constant_values=ignore_index)

    # TODO(synk): for extremely large vocab (one 8-row tile >> a few MiB), also
    # tile C with a streaming (flash-style) logsumexp over C-blocks.

    # Explicit VMEM budget: double-buffered logits tile + (TILE_N,1) int32
    # targets (padded to 128 lanes in VMEM) + (8,128) output block + headroom.
    vmem_bytes = (2 * tile_n * c * itemsize
                  + 2 * tile_n * 128 * 4
                  + 2 * 8 * 128 * 4
                  + (2 << 20))
    vmem_limit = int(min(max(vmem_bytes, 16 << 20), 64 << 20))

    kernel = functools.partial(
        _ls_ce_tile_kernel,
        ignore_index=int(ignore_index),
        n_total=int(n),
        tile_n=int(tile_n),
    )

    partials = pl.pallas_call(
        kernel,
        out_shape=jax.ShapeDtypeStruct((num_tiles, 8, 128), jnp.float32),
        grid=(num_tiles,),
        in_specs=[
            pl.BlockSpec((tile_n, c), lambda i: (i, 0)),   # logits tile
            pl.BlockSpec((tile_n, 1), lambda i: (i, 0)),   # targets tile
        ],
        out_specs=pl.BlockSpec((1, 8, 128), lambda i: (i, 0, 0)),
        compiler_params=pltpu.CompilerParams(
            dimension_semantics=("parallel",),
            vmem_limit_bytes=vmem_limit,
        ),
    )(x, tgt2d)

    # Tiny final reduction + combine in the wrapper (global denominators).
    smooth_sum = jnp.sum(partials[:, 0, 0])
    nll_sum = jnp.sum(partials[:, 0, 1])
    n_valid = jnp.sum(partials[:, 0, 2])

    eps = float(smoothing)
    if reduction == "sum":
        smooth = smooth_sum
        nll = nll_sum
    else:  # 'mean': smooth averages ALL rows, nll averages non-ignored rows
        smooth = smooth_sum / jnp.float32(n)
        nll = nll_sum / n_valid
    return smooth * (eps / c) + (1.0 - eps) * nll


def _reference(output, target, *, smoothing=0.1, reduction="mean",
               ignore_index=-100):
    c = output.shape[-1]
    logp = jax.nn.log_softmax(output.astype(jnp.float32), axis=-1)
    if reduction == "sum":
        smooth = -jnp.sum(logp)
    else:
        smooth = jnp.mean(-jnp.sum(logp, axis=-1))
    valid = target != ignore_index
    idx = jnp.where(valid, target, 0).astype(jnp.int32)
    picked = jnp.take_along_axis(logp, idx[:, None], axis=-1)[:, 0]
    nll_sum = -jnp.sum(jnp.where(valid, picked, 0.0))
    if reduction == "sum":
        nll = nll_sum
    else:
        nll = nll_sum / jnp.sum(valid.astype(jnp.float32))
    return smooth * smoothing / c + (1.0 - smoothing) * nll


if __name__ == "__main__":
    key = jax.random.PRNGKey(0)
    k1, k2 = jax.random.split(key)

    # Small shapes: N deliberately NOT a multiple of tile_n (exercises the
    # padded-row masking) and tile_n=8 forces a multi-tile grid.
    N, C = 20, 32
    logits = jax.random.normal(k1, (N, C), dtype=jnp.float32)
    targets = jax.random.randint(k2, (N,), 0, C, dtype=jnp.int32)
    targets = targets.at[3].set(-100)       # exercise ignore_index masking

    ok = True
    for red in ("mean", "sum"):
        loss = label_smoothing_cross_entropy(logits, targets, reduction=red,
                                             tile_n=8)
        loss = jax.block_until_ready(loss)
        ref = _reference(logits, targets, reduction=red)
        if not jnp.allclose(loss, ref, rtol=1e-5, atol=1e-4):
            ok = False
            print("MISMATCH", red, loss, ref)
    assert ok, "kernel does not match reference"
    print("KERNEL_OK")
</pallas_src>

<mosaic_0001>
module attributes {stable_mosaic.version = 11 : i64} {
  func.func @_ls_ce_tile_kernel(%arg0: i32, %arg1: memref<8x32xf32, #tpu.memory_space<vmem>>, %arg2: memref<8x1xi32, #tpu.memory_space<vmem>>, %arg3: memref<1x8x128xf32, #tpu.memory_space<vmem>>) attributes {dimension_semantics = [#tpu.dimension_semantics<parallel>], iteration_bounds = array<i64: 3>, scalar_prefetch = 0 : i64, scratch_operands = 0 : i64, tpu.core_type = #tpu.core_type<tc>, window_params = [{transform_indices = @transform_0, window_bounds = array<i64: 8, 32>}, {transform_indices = @transform_1, window_bounds = array<i64: 8, 1>}, {transform_indices = @transform_2, window_bounds = array<i64: 1, 8, 128>}]} {
    %c0 = arith.constant 0 : index
    %c0_0 = arith.constant 0 : index
    %0 = vector.load %arg1[%c0, %c0_0] : memref<8x32xf32, #tpu.memory_space<vmem>>, vector<8x32xf32>
    %c8_i32 = arith.constant 8 : i32
    %1 = arith.muli %arg0, %c8_i32 : i32
    %2 = tpu.iota {dimensions = array<i32: 0>} : vector<8x1xi32>
    %3 = vector.broadcast %1 : i32 to vector<8x1xi32>
    %4 = arith.addi %3, %2 : vector<8x1xi32>
    %c20_i32 = arith.constant 20 : i32
    %5 = vector.broadcast %c20_i32 : i32 to vector<8x1xi32>
    %6 = arith.cmpi slt, %4, %5 : vector<8x1xi32>
    %cst = arith.constant dense<0xFF800000> : vector<8xf32>
    %7 = vector.multi_reduction <maximumf>, %0, %cst [1] : vector<8x32xf32> to vector<8xf32>
    %8 = vector.shape_cast %7 : vector<8xf32> to vector<8x1xf32>
    %9 = vector.broadcast %8 : vector<8x1xf32> to vector<8x32xf32>
    %10 = arith.subf %0, %9 : vector<8x32xf32>
    %11 = math.exp %10 : vector<8x32xf32>
    %cst_1 = arith.constant dense<0.000000e+00> : vector<8xf32>
    %12 = vector.multi_reduction <add>, %11, %cst_1 [1] : vector<8x32xf32> to vector<8xf32>
    %13 = vector.shape_cast %12 : vector<8xf32> to vector<8x1xf32>
    %14 = math.log %13 : vector<8x1xf32>
    %cst_2 = arith.constant dense<0.000000e+00> : vector<8xf32>
    %15 = vector.multi_reduction <add>, %10, %cst_2 [1] : vector<8x32xf32> to vector<8xf32>
    %16 = vector.shape_cast %15 : vector<8xf32> to vector<8x1xf32>
    %cst_3 = arith.constant 3.200000e+01 : f32
    %17 = vector.broadcast %cst_3 : f32 to vector<8x1xf32>
    %18 = arith.mulf %17, %14 : vector<8x1xf32>
    %19 = arith.subf %18, %16 : vector<8x1xf32>
    %cst_4 = arith.constant 0.000000e+00 : f32
    %20 = vector.broadcast %cst_4 : f32 to vector<8x1xf32>
    %21 = arith.select %6, %19, %20 : vector<8x1xi1>, vector<8x1xf32>
    %22 = vector.shape_cast %21 : vector<8x1xf32> to vector<1x8x1xf32>
    %cst_5 = arith.constant dense<0.000000e+00> : vector<1xf32>
    %23 = vector.multi_reduction <add>, %22, %cst_5 [1, 2] : vector<1x8x1xf32> to vector<1xf32>
    %24 = vector.shape_cast %23 : vector<1xf32> to vector<1x1x1xf32>
    %25 = vector.extract %24[0, 0, 0] : f32 from vector<1x1x1xf32>
    %c0_6 = arith.constant 0 : index
    %c0_7 = arith.constant 0 : index
    %26 = vector.load %arg2[%c0_6, %c0_7] : memref<8x1xi32, #tpu.memory_space<vmem>>, vector<8x1xi32>
    %27 = tpu.iota {dimensions = array<i32: 1>} : vector<8x32xi32>
    %28 = vector.broadcast %26 : vector<8x1xi32> to vector<8x32xi32>
    %29 = arith.cmpi eq, %27, %28 : vector<8x32xi32>
    %cst_8 = arith.constant 0.000000e+00 : f32
    %30 = vector.broadcast %cst_8 : f32 to vector<8x32xf32>
    %31 = arith.select %29, %10, %30 : vector<8x32xi1>, vector<8x32xf32>
    %cst_9 = arith.constant dense<0.000000e+00> : vector<8xf32>
    %32 = vector.multi_reduction <add>, %31, %cst_9 [1] : vector<8x32xf32> to vector<8xf32>
    %33 = vector.shape_cast %32 : vector<8xf32> to vector<8x1xf32>
    %34 = arith.subf %33, %14 : vector<8x1xf32>
    %c-100_i32 = arith.constant -100 : i32
    %35 = vector.broadcast %c-100_i32 : i32 to vector<8x1xi32>
    %36 = arith.cmpi ne, %26, %35 : vector<8x1xi32>
    %37 = arith.andi %36, %6 : vector<8x1xi1>
    %cst_10 = arith.constant 0.000000e+00 : f32
    %38 = vector.broadcast %cst_10 : f32 to vector<8x1xf32>
    %39 = arith.select %37, %34, %38 : vector<8x1xi1>, vector<8x1xf32>
    %40 = vector.shape_cast %39 : vector<8x1xf32> to vector<1x8x1xf32>
    %cst_11 = arith.constant dense<0.000000e+00> : vector<1xf32>
    %41 = vector.multi_reduction <add>, %40, %cst_11 [1, 2] : vector<1x8x1xf32> to vector<1xf32>
    %42 = vector.shape_cast %41 : vector<1xf32> to vector<1x1x1xf32>
    %43 = vector.extract %42[0, 0, 0] : f32 from vector<1x1x1xf32>
    %cst_12 = arith.constant 0.000000e+00 : f32
    %44 = arith.subf %cst_12, %43 : f32
    %45 = arith.extui %37 : vector<8x1xi1> to vector<8x1xi32>
    %46 = arith.sitofp %45 : vector<8x1xi32> to vector<8x1xf32>
    %47 = vector.shape_cast %46 : vector<8x1xf32> to vector<1x8x1xf32>
    %cst_13 = arith.constant dense<0.000000e+00> : vector<1xf32>
    %48 = vector.multi_reduction <add>, %47, %cst_13 [1, 2] : vector<1x8x1xf32> to vector<1xf32>
    %49 = vector.shape_cast %48 : vector<1xf32> to vector<1x1x1xf32>
    %50 = vector.extract %49[0, 0, 0] : f32 from vector<1x1x1xf32>
    %51 = tpu.iota {dimensions = array<i32: 1>} : vector<1x8x128xi32>
    %52 = tpu.iota {dimensions = array<i32: 2>} : vector<1x8x128xi32>
    %c0_i32 = arith.constant 0 : i32
    %53 = vector.broadcast %c0_i32 : i32 to vector<1x8x128xi32>
    %54 = arith.cmpi eq, %51, %53 : vector<1x8x128xi32>
    %c0_i32_14 = arith.constant 0 : i32
    %55 = vector.broadcast %c0_i32_14 : i32 to vector<1x8x128xi32>
    %56 = arith.cmpi eq, %52, %55 : vector<1x8x128xi32>
    %57 = arith.andi %54, %56 : vector<1x8x128xi1>
    %c1_i32 = arith.constant 1 : i32
    %58 = vector.broadcast %c1_i32 : i32 to vector<1x8x128xi32>
    %59 = arith.cmpi eq, %52, %58 : vector<1x8x128xi32>
    %60 = arith.andi %54, %59 : vector<1x8x128xi1>
    %c2_i32 = arith.constant 2 : i32
    %61 = vector.broadcast %c2_i32 : i32 to vector<1x8x128xi32>
    %62 = arith.cmpi eq, %52, %61 : vector<1x8x128xi32>
    %63 = arith.andi %54, %62 : vector<1x8x128xi1>
    %cst_15 = arith.constant 0.000000e+00 : f32
    %64 = vector.broadcast %50 : f32 to vector<1x8x128xf32>
    %65 = vector.broadcast %cst_15 : f32 to vector<1x8x128xf32>
    %66 = arith.select %63, %64, %65 : vector<1x8x128xi1>, vector<1x8x128xf32>
    %67 = vector.broadcast %44 : f32 to vector<1x8x128xf32>
    %68 = arith.select %60, %67, %66 : vector<1x8x128xi1>, vector<1x8x128xf32>
    %69 = vector.broadcast %25 : f32 to vector<1x8x128xf32>
    %70 = arith.select %57, %69, %68 : vector<1x8x128xi1>, vector<1x8x128xf32>
    %c0_16 = arith.constant 0 : index
    %c0_17 = arith.constant 0 : index
    %c0_18 = arith.constant 0 : index
    %71 = vector.load %arg3[%c0_16, %c0_17, %c0_18] : memref<1x8x128xf32, #tpu.memory_space<vmem>>, vector<1x8x128xf32>
    tpu.vector_store %arg3[%c0_16, %c0_17, %c0_18], %70 {strides = array<i32>} : memref<1x8x128xf32, #tpu.memory_space<vmem>>, vector<1x8x128xf32>,
    return
  }
  func.func @transform_0(%arg0: i32) -> (i32, i32) {
    %c0_i32 = arith.constant 0 : i32
    %c0_i32_0 = arith.constant 0 : i32
    return %arg0, %c0_i32 : i32, i32
  }
  func.func @transform_1(%arg0: i32) -> (i32, i32) {
    %c0_i32 = arith.constant 0 : i32
    %c0_i32_0 = arith.constant 0 : i32
    return %arg0, %c0_i32 : i32, i32
  }
  func.func @transform_2(%arg0: i32) -> (i32, i32, i32) {
    %c0_i32 = arith.constant 0 : i32
    %c0_i32_0 = arith.constant 0 : i32
    %c0_i32_1 = arith.constant 0 : i32
    return %arg0, %c0_i32, %c0_i32_0 : i32, i32, i32
  }
}

</mosaic_0001>

<llo_original>
// kernel: tpu_custom_call.1
$region0: #{tpu_custom_call.1}
  #allocation0 [shape = 'u32[]', space=smem, size = 0x4, offset = 0x4, fixed_abs, tag = 'smem constant byte address 0x4 - core index']
  #allocation1 [shape = 'u32[144,128]{1,0:T(1,128)}', space=vmem, size = 0x12000, scoped, tag = 'internal scratch']
  %s0 = inlined_call_operand.vmem [shape: f32[24,32], index: 0, kind: input, shape index: {}]
  %s1 = inlined_call_operand.vmem [shape: s32[24,1], index: 1, kind: input, shape index: {}]
  %s2 = inlined_call_operand.hbm [shape: f32[3,8,128], index: 2, kind: output, shape index: {}]
  %s3 = sld [smem:[#allocation0]]
  $region41: #{tpu_custom_call.1} parent=0
    _
  %s5 = ssub.s32 1, %s3
  %s6 = scalar_select 0, %s5, %s3
  $region1: #{tpu_custom_call.1} parent=0
    #allocation2 [shape = 'u8[8192]{0}', space=vmem, size = 0x2000, scoped, tag = 'output window, operand 0']
    #allocation3 [shape = 's32[2]{0}', space=sflag, size = 0x8, scoped, tag = 'scoped memory for tpu_custom_call.1']
    %7 = vsyncpa [#allocation3], 0
    %s8 = scalar_lea.sflag [#allocation3], 1
    %9 = vsyncpa %s8, 0
    loop: start=0, step=1, limit=5
    $region2: #{tpu_custom_call.1} parent=1 // loop_pre_header
      _
    $region3: #{tpu_custom_call.1} parent=1 // loop_header
      %s11 = sphi 0, %s15
      %p12 = scmp.ge.s32.totalorder %s11, 5
      %s21 = sphi 0, %s23
      %s24 = sphi 0, %s21
      %s25 = sphi 0, %s24
      %s41 = sphi 0, %s25
      %s47 = sphi 0, %s49
      %s50 = sphi 0, %s47
      %s51 = sphi 0, %s50
      %s67 = sphi 0, %s51
      %s73 = sphi 0, %s75
      %s76 = sphi 0, %s73
      %s77 = sphi 0, %s76
      %s93 = sphi 0, %s77
    $region4: #{tpu_custom_call.1} parent=1 // loop_header_branch
      %14 = sbr.rel (%p12) target = $region8
    $region5: #{tpu_custom_call.1} parent=1 // loop_body
      %s16 = ssub.s32 %s11, 1
      %s17 = ssub.s32 %s11, 2
      %s18 = sadd.s32 %s11, 1
      %s19 = ssub.s32 %s11, %s18
      %p20 = scmp.eq.s32.totalorder %s19, 0
      %s22 = sadd.s32 %s21, 1
      %s23 = scalar_select %p20, %s21, %s22
      %p26 = pneg %p20
      %p27 = scmp.eq.s32.totalorder %s11, 2
      %p28 = por %p26, %p27
      %p29 = scmp.ne.s32.totalorder %s21, %s24
      %p30 = scmp.eq.s32.totalorder %s11, 0
      %p31 = por %p29, %p30
      %p32 = scmp.ne.s32.totalorder %s21, %s24
      %p33 = scmp.eq.s32.totalorder %s16, 2
      %p34 = por %p32, %p33
      %p35 = scmp.ne.s32.totalorder %s24, %s25
      %p36 = scmp.eq.s32.totalorder %s16, 0
      %p37 = por %p35, %p36
      %p38 = scmp.ne.s32.totalorder %s24, %s25
      %p39 = scmp.eq.s32.totalorder %s17, 2
      %p40 = por %p38, %p39
      %p42 = scmp.ne.s32.totalorder %s25, %s41
      %p43 = scmp.eq.s32.totalorder %s17, 0
      %p44 = por %p42, %p43
      %s45 = ssub.s32 %s11, %s18
      %p46 = scmp.eq.s32.totalorder %s45, 0
      %s48 = sadd.s32 %s47, 1
      %s49 = scalar_select %p46, %s47, %s48
      %p52 = pneg %p46
      %p53 = scmp.eq.s32.totalorder %s11, 2
      %p54 = por %p52, %p53
      %p55 = scmp.ne.s32.totalorder %s47, %s50
      %p56 = scmp.eq.s32.totalorder %s11, 0
      %p57 = por %p55, %p56
      %p58 = scmp.ne.s32.totalorder %s47, %s50
      %p59 = scmp.eq.s32.totalorder %s16, 2
      %p60 = por %p58, %p59
      %p61 = scmp.ne.s32.totalorder %s50, %s51
      %p62 = scmp.eq.s32.totalorder %s16, 0
      %p63 = por %p61, %p62
      %p64 = scmp.ne.s32.totalorder %s50, %s51
      %p65 = scmp.eq.s32.totalorder %s17, 2
      %p66 = por %p64, %p65
      %p68 = scmp.ne.s32.totalorder %s51, %s67
      %p69 = scmp.eq.s32.totalorder %s17, 0
      %p70 = por %p68, %p69
      %s71 = ssub.s32 %s11, %s18
      %p72 = scmp.eq.s32.totalorder %s71, 0
      %s74 = sadd.s32 %s73, 1
      %s75 = scalar_select %p72, %s73, %s74
      %p78 = pneg %p72
      %p79 = scmp.eq.s32.totalorder %s11, 2
      %p80 = por %p78, %p79
      %p81 = scmp.ne.s32.totalorder %s73, %s76
      %p82 = scmp.eq.s32.totalorder %s11, 0
      %p83 = por %p81, %p82
      %p84 = scmp.ne.s32.totalorder %s73, %s76
      %p85 = scmp.eq.s32.totalorder %s16, 2
      %p86 = por %p84, %p85
      %p87 = scmp.ne.s32.totalorder %s76, %s77
      %p88 = scmp.eq.s32.totalorder %s16, 0
      %p89 = por %p87, %p88
      %p90 = scmp.ne.s32.totalorder %s76, %s77
      %p91 = scmp.eq.s32.totalorder %s17, 2
      %p92 = por %p90, %p91
      %p94 = scmp.ne.s32.totalorder %s77, %s93
      %p95 = scmp.eq.s32.totalorder %s17, 0
      %p96 = por %p94, %p95
      %p97 = scmp.le.s32.totalorder 1, %s11
      %p98 = scmp.lt.s32.totalorder %s11, 4
      %p99 = pnand %p97, %p98
      %p100 = pneg %p99
      // Predicated region
      $region9: #{tpu_custom_call.1} parent=5 // pred_check
        _
      $region10: #{tpu_custom_call.1} parent=5 // pred_check_branch
        %102 = sbr.rel (%p99) target = $region12
      $region11: #{tpu_custom_call.1} parent=5 // pred_region
        %s103 = ssub.s32 %s11, 1
      $region12: #{tpu_custom_call.1} parent=5 // pred_fallthru
        _
      %p104 = scmp.lt.s32.totalorder %s11, 3
      // Predicated region
      $region13: #{tpu_custom_call.1} parent=5 // pred_check
        %p105 = pneg %p104
      $region14: #{tpu_custom_call.1} parent=5 // pred_check_branch
        %107 = sbr.rel (%p105) target = $region16
      $region15: #{tpu_custom_call.1} parent=5 // pred_region
        // Predicated region
        $region17: #{tpu_custom_call.1} parent=15 // pred_check
          %p108 = pneg %p31
        $region18: #{tpu_custom_call.1} parent=15 // pred_check_branch
          %110 = sbr.rel (%p108) target = $region20
        $region19: #{tpu_custom_call.1} parent=15 // pred_region
          %p111 = scmp.lt.s32.totalorder %s11, 2
          %s112 = scalar_select %p111, %s11, 2
          %s113 = smul.addr %s112, 8
          %s114 = scalar_lea.vmem %s0, %s113
        $region20: #{tpu_custom_call.1} parent=15 // pred_fallthru
          _
        // Predicated region
        $region21: #{tpu_custom_call.1} parent=15 // pred_check
          %p115 = pneg %p57
        $region22: #{tpu_custom_call.1} parent=15 // pred_check_branch
          %117 = sbr.rel (%p115) target = $region24
        $region23: #{tpu_custom_call.1} parent=15 // pred_region
          %p118 = scmp.lt.s32.totalorder %s11, 2
          %s119 = scalar_select %p118, %s11, 2
          %s120 = smul.addr %s119, 8
          %s121 = scalar_lea.vmem %s1, %s120
        $region24: #{tpu_custom_call.1} parent=15 // pred_fallthru
          _
      $region16: #{tpu_custom_call.1} parent=5 // pred_fallthru
        _
      %p122 = scmp.le.s32.totalorder 1, %s11
      %p123 = scmp.lt.s32.totalorder %s11, 4
      %p124 = pnand %p122, %p123
      %p125 = pneg %p124
      // Predicated region
      $region25: #{tpu_custom_call.1} parent=5 // pred_check
        _
      $region26: #{tpu_custom_call.1} parent=5 // pred_check_branch
        %127 = sbr.rel (%p124) target = $region28
      $region27: #{tpu_custom_call.1} parent=5 // pred_region
        %s128 = ssub.s32 %s11, 1
        %p129 = scmp.lt.s32.totalorder %s16, 2
        %s130 = scalar_select %p129, %s16, 2
        %s131 = smul.addr %s130, 8
        %s132 = scalar_lea.vmem %s0, %s131
        %p133 = pneg %p37
        %p134 = pneg %p34
        %p135 = scmp.lt.s32.totalorder %s16, 2
        %s136 = scalar_select %p135, %s16, 2
        %s137 = smul.addr %s136, 8
        %s138 = scalar_lea.vmem %s1, %s137
        %p139 = pneg %p63
        %p140 = pneg %p60
        %p141 = pneg %p89
        %p142 = pneg %p86
        %s143 = sand.u32 %s76, 1
        %s144 = scalar_lea.sflag [#allocation3], %s143
        %s145 = sand.u32 %s76, 1
        %s146 = smul.addr %s145, 8
        %s147 = scalar_lea.vmem [#allocation2], %s146
        %p148 = scmp.lt.s32.totalorder %s16, 2
        %s149 = scalar_select %p148, %s16, 2
        %s150 = smul.addr %s149, 8
        %s151 = scalar_lea.vmem %s0, %s150
        %p152 = scmp.lt.s32.totalorder %s16, 2
        %s153 = scalar_select %p152, %s16, 2
        %s154 = smul.addr %s153, 8
        %s155 = scalar_lea.vmem %s1, %s154
        %v156 = vld [vmem:[%s151] sm:$0xff]
        %s157 = smul.u32 %s16, 8
        %v158 = vlaneseq
        %v159 = vshrl.u32 %v158, 7
        %v160 = vstv %s157
        %v161 = vadd.s32 %v160, %v159
        %vm162 = vcmp.lt.s32.totalorder %v161, 20
        %vm163 = vcmask 261120
        %v164 = vsel %vm163, %v156, -inf
        %165 = vmax.xlane.f32.xlu0 %v164
        %v166 = vpop.xlane.xlu0 %165
        %v167 = vsub.f32 %v156, %v166
        %v168 = vmul.f32 %v167, 1.442695
        %v169 = vpow.pop %v168
        %v170 = vsel %vm163, %v169, 0.0
        %171 = vadd.xlane.f32.xlu0 %v170
        %v172 = vpop.xlane.xlu0 %171
        %v173 = vlog2.pop %v172
        %v174 = vmul.f32 %v173, 0.6931472
        %v175 = vsel %vm163, %v167, 0.0
        %176 = vadd.xlane.f32.xlu0 %v175
        %v177 = vpop.xlane.xlu0 %176
        %v178 = vmul.f32 %v174, 32.0
        %v179 = vsub.f32 %v178, %v177
        %v180 = vsel %vm162, %v179, 0.0
        %vm181 = vcmask 7168
        %v182 = vsel %vm181, %v180, 0.0
        %183 = vadd.xlane.f32.xlu0 %v182
        %v184 = vpop.xlane.xlu0 %183
        %v185 = vrot.slane %v184, 4
        %v186 = vadd.f32 %v184, %v185
        %v187 = vrot.slane %v186, 2
        %v188 = vadd.f32 %v186, %v187
        %v189 = vrot.slane %v188, 1
        %v190 = vadd.f32 %v188, %v189
        %s191 = vtos %v190
        %v192 = vld [vmem:[%s155] sm:$0xff]
        %v193 = vlaneseq
        %v194 = vand.u32 %v193, 127
        %195 = vset.pattern.permute.xlu0 0
        %196 = vperm.xlu0 %195, %v192
        %v197 = vpop.permute.xlu0 %196
        %vm198 = vcmp.eq.s32.totalorder %v194, %v197
        %v199 = vsel %vm198, %v167, 0.0
        %v200 = vsel %vm163, %v199, 0.0
        %201 = vadd.xlane.f32.xlu0 %v200
        %v202 = vpop.xlane.xlu0 %201
        %v203 = vsub.f32 %v202, %v174
        %vm204 = vcmp.ne.s32.totalorder %v192, 4294967196
        %vm205 = vmand %vm204, %vm162
        %v206 = vsel %vm205, %v203, 0.0
        %v207 = vsel %vm181, %v206, 0.0
        %208 = vadd.xlane.f32.xlu0 %v207
        %v209 = vpop.xlane.xlu0 %208
        %v210 = vrot.slane %v209, 4
        %v211 = vadd.f32 %v209, %v210
        %v212 = vrot.slane %v211, 2
        %v213 = vadd.f32 %v211, %v212
        %v214 = vrot.slane %v213, 1
        %v215 = vadd.f32 %v213, %v214
        %s216 = vtos %v215
        %s217 = ssub.f32 0.0, %s216
        %v218 = vsel %vm205, 1, 0
        %v219 = vcvt.s32.f32 %v218
        %v220 = vsel %vm181, %v219, 0.0
        %221 = vadd.xlane.f32.xlu0 %v220
        %v222 = vpop.xlane.xlu0 %221
        %v223 = vrot.slane %v222, 4
        %v224 = vadd.f32 %v222, %v223
        %v225 = vrot.slane %v224, 2
        %v226 = vadd.f32 %v224, %v225
        %v227 = vrot.slane %v226, 1
        %v228 = vadd.f32 %v226, %v227
        %s229 = vtos %v228
        %vm230 = vcmp.eq.s32.totalorder %v159, 0
        %vm231 = vcmp.eq.s32.totalorder %v194, 0
        %vm232 = vmand %vm230, %vm231
        %vm233 = vcmp.eq.s32.totalorder %v194, 1
        %vm234 = vmand %vm230, %vm233
        %vm235 = vcmp.eq.s32.totalorder %v194, 2
        %vm236 = vmand %vm230, %vm235
        %v237 = vstv %s229
        %v238 = vsel %vm236, %v237, 0.0
        %v239 = vstv %s217
        %v240 = vsel %vm234, %v239, %v238
        %v241 = vstv %s191
        %v242 = vsel %vm232, %v241, %v240
        %243 = vst [vmem:[%s147] sm:$0xff] %v242
        %s244 = sand.u32 %s76, 1
        %s245 = scalar_lea.sflag [#allocation3], %s244
        %s246 = sand.u32 %s76, 1
        %s247 = smul.addr %s246, 8
        %s248 = scalar_lea.vmem [#allocation2], %s247
        // Predicated region
        $region29: #{tpu_custom_call.1} parent=27 // pred_check
          %p249 = pneg %p86
        $region30: #{tpu_custom_call.1} parent=27 // pred_check_branch
          %251 = sbr.rel (%p249) target = $region32
        $region31: #{tpu_custom_call.1} parent=27 // pred_region
          %s253 = ssub.s32 128, 128
          %254 = vsyncadd %s245, %s253
          %s255 = smul.addr %s16, 128
          %s256 = scalar_lea.hbm %s2, %s255
          %s258 = sshll.u32 %s248, 4
          %s259 = int_to_ptr.vmem [resolvable:$true] %s258
          %261 = dma.vmem_to_hbm [thread:$0]  %s259, 128, %s256, %s245
        $region32: #{tpu_custom_call.1} parent=27 // pred_fallthru
          _
      $region28: #{tpu_custom_call.1} parent=5 // pred_fallthru
        _
      %p262 = scmp.le.s32.totalorder 2, %s11
      // Predicated region
      $region33: #{tpu_custom_call.1} parent=5 // pred_check
        %p263 = pneg %p262
      $region34: #{tpu_custom_call.1} parent=5 // pred_check_branch
        %265 = sbr.rel (%p263) target = $region36
      $region35: #{tpu_custom_call.1} parent=5 // pred_region
        %s266 = ssub.s32 %s11, 2
        // Predicated region
        $region37: #{tpu_custom_call.1} parent=35 // pred_check
          %p267 = pneg %p92
        $region38: #{tpu_custom_call.1} parent=35 // pred_check_branch
          %269 = sbr.rel (%p267) target = $region40
        $region39: #{tpu_custom_call.1} parent=35 // pred_region
          %s270 = sand.u32 %s77, 1
          %s271 = scalar_lea.sflag [#allocation3], %s270
          %s272 = sand.u32 %s77, 1
          %s273 = smul.addr %s272, 8
          %s274 = scalar_lea.vmem [#allocation2], %s273
          %275 = dma.done %s271, 128
        $region40: #{tpu_custom_call.1} parent=35 // pred_fallthru
          _
      $region36: #{tpu_custom_call.1} parent=5 // pred_fallthru
        _
    $region6: #{tpu_custom_call.1} parent=1 // loop_footer
      %s15 = sadd.s32 1, %s11
    $region7: #{tpu_custom_call.1} parent=1 // loop_footer_branch
      %10 = sbr.rel target = $region3
    $region8: #{tpu_custom_call.1} parent=1 // loop_exit
      _
    %276 = vsyncpa [#allocation3], 1
    %s277 = scalar_lea.sflag [#allocation3], 1
    %278 = vsyncpa %s277, 1

</llo_original>
